<compile_context>
chip_gen: v5e
topology: v5e:2x2
jax: 0.10.0
libtpu: 0.0.40
codegen_flags: <defaults>
</compile_context>

<pallas_src>
import functools

import jax
import jax.numpy as jnp
from jax import lax
from jax.experimental import pallas as pl
from jax.experimental.pallas import tpu as pltpu


def _round_up(x, m):
    return (x + m - 1) // m * m


def _device_kind():
    try:
        return jax.devices()[0].device_kind.lower()
    except Exception:
        return ""


_KIND = _device_kind()
# bf16 VPU/EUP exist from v6e onward; v5e and older keep f32 activation math.
_BF16_ACT = any(t in _KIND for t in ("v6", "v7", "7x"))
# Chips with 2 TensorCores behind one device (megacore): v4, v5p, v7x.
_MULTI_TC = any(t in _KIND for t in ("v4", "v5p", "v7", "7x"))

_TM_MAX = 4096  # rows per tile; ~2.5 MiB double-buffered VMEM -> safe on all gens


def _conv_gemm_kernel(p_ref, wt_ref, b_ref, o_ref, *, bf16_act):
    # p_ref:  (TM, Kp)   bf16 im2col patches tile
    # wt_ref: (Cout, Kp) bf16 transposed weights (grid-invariant)
    # b_ref:  (Cout, 1)  f32 bias (grid-invariant)
    # o_ref:  (Cout, TM) f32 channel-major output tile
    #
    # out[c, m] = sum_k wt[c, k] * p[m, k]  -- A @ B^T, MXU-native, f32 acc.
    acc = lax.dot_general(
        wt_ref[...], p_ref[...],
        dimension_numbers=(((1,), (1,)), ((), ())),
        preferred_element_type=jnp.float32)              # (Cout, TM) f32
    acc = acc + b_ref[...]                               # bias broadcast along lanes
    if bf16_act:                                         # v6e/v7x: bf16 EUP
        acc = acc.astype(jnp.bfloat16)
    t = jnp.tanh(acc)
    # sigmoid(t) == 0.5 * (1 + tanh(t / 2)) -- exact identity, fewer EUP pushes.
    o_ref[...] = (0.5 * (jnp.tanh(0.5 * t) + 1.0)).astype(o_ref.dtype)


@functools.partial(jax.jit, static_argnames=("stride", "padding"))
def model_tanh_forward(x_nchw, weight_ocihw, bias_oc, *, stride=2, padding=1):
    """Forward pass of ModelTanh.

    x_nchw:       (N, Cin, H, W)      float32
    weight_ocihw: (Cout, Cin, KH, KW) float32 (PyTorch Conv2d layout)
    bias_oc:      (Cout,)             float32
    returns:      (N, Cout, OH, OW)   float32
    """
    N, Cin, H, W = x_nchw.shape
    Cout, _, KH, KW = weight_ocihw.shape
    OH = (H + 2 * padding - KH) // stride + 1
    OW = (W + 2 * padding - KW) // stride + 1
    K = KH * KW * Cin
    M = N * OH * OW

    # ---- tile geometry -----------------------------------------------------
    Kp = _round_up(K, 32)                    # 27 -> 32 (bf16 sublane), NOT 128
    Mr = _round_up(M, 128)                   # lane-dense 128-granule output rows
    n_tiles = max(1, pl.cdiv(Mr, _TM_MAX))
    if _MULTI_TC and Mr >= 256:
        # Only force >=2 (even) grid steps where a second TensorCore exists.
        n_tiles = _round_up(max(n_tiles, 2), 2)
    TM = _round_up(pl.cdiv(Mr, n_tiles), 128)
    Mp = TM * n_tiles

    # ---- im2col (glue, plain JAX; single materialization, K-pad fused) -----
    x_nhwc = jnp.transpose(x_nchw, (0, 2, 3, 1)).astype(jnp.bfloat16)
    xp = jnp.pad(x_nhwc, ((0, 0), (padding, padding), (padding, padding), (0, 0)))
    cols = []
    for kh in range(KH):
        for kw in range(KW):
            cols.append(xp[:, kh:kh + OH * stride:stride,
                            kw:kw + OW * stride:stride, :])     # N,OH,OW,Cin
    if Kp > K:
        cols.append(jnp.zeros((N, OH, OW, Kp - K), jnp.bfloat16))
    patches = jnp.concatenate(cols, axis=-1).reshape(M, Kp)      # (M, Kp) bf16
    if Mp > M:                                                   # usually a no-op
        patches = jnp.pad(patches, ((0, Mp - M), (0, 0)))
    # TODO(synk): fuse im2col into the kernel (memory_space=pl.ANY input +
    # nine (TM,Cin)x(Cin,Cout) tap dots) to drop this HBM materialization too.

    # w_t[oc, (kh*KW+kw)*Cin + c] = weight[oc, c, kh, kw]  (matches patch cols)
    w_t = jnp.transpose(weight_ocihw, (0, 2, 3, 1)).reshape(Cout, K)
    w_t = jnp.pad(w_t, ((0, 0), (0, Kp - K))).astype(jnp.bfloat16)   # (Cout, Kp)
    b_p = bias_oc.astype(jnp.float32).reshape(Cout, 1)               # (Cout, 1)

    # ---- Pallas GEMM + bias + tanh + sigmoid (channel-major output) --------
    kernel = functools.partial(_conv_gemm_kernel, bf16_act=_BF16_ACT)
    out_p = pl.pallas_call(
        kernel,
        out_shape=jax.ShapeDtypeStruct((Cout, Mp), jnp.float32),
        grid_spec=pl.GridSpec(
            grid=(n_tiles,),
            in_specs=[
                pl.BlockSpec((TM, Kp), lambda i: (i, 0)),     # patches tile
                pl.BlockSpec((Cout, Kp), lambda i: (0, 0)),   # weights (invariant)
                pl.BlockSpec((Cout, 1), lambda i: (0, 0)),    # bias (invariant)
            ],
            out_specs=pl.BlockSpec((Cout, TM), lambda i: (0, i)),
        ),
        compiler_params=pltpu.CompilerParams(
            dimension_semantics=("parallel",)),
    )(patches, w_t, b_p)

    # ---- back to the module's NCHW layout (cheap leading-dim swap only) ----
    out = out_p if Mp == M else out_p[:, :M]
    out = out.reshape(Cout, N, OH, OW)
    return jnp.transpose(out, (1, 0, 2, 3))                      # N,Cout,OH,OW


def _reference_forward(x_nchw, weight_ocihw, bias_oc, *, stride=2, padding=1):
    """Pure-JAX f32 reference (lax conv) for correctness check."""
    y = lax.conv_general_dilated(
        x_nchw, weight_ocihw,
        window_strides=(stride, stride),
        padding=((padding, padding), (padding, padding)),
        dimension_numbers=("NCHW", "OIHW", "NCHW"),
    ) + bias_oc[None, :, None, None]
    return jax.nn.sigmoid(jnp.tanh(y))


if __name__ == "__main__":
    key = jax.random.PRNGKey(0)
    kx, kw, kb = jax.random.split(key, 3)

    # Small shapes consistent with the module: Conv2d(3, 60, 3, stride=2, padding=1)
    N, Cin, H, W = 2, 3, 16, 16
    Cout, KH, KW = 60, 3, 3

    x = jax.random.normal(kx, (N, Cin, H, W), dtype=jnp.float32)
    # Deterministic parameter init (PyTorch-like uniform fan-in scaling).
    fan_in = Cin * KH * KW
    bound = 1.0 / (fan_in ** 0.5)
    weight = jax.random.uniform(kw, (Cout, Cin, KH, KW), jnp.float32, -bound, bound)
    bias = jax.random.uniform(kb, (Cout,), jnp.float32, -bound, bound)

    out = model_tanh_forward(x, weight, bias, stride=2, padding=1)
    out = jax.block_until_ready(out)

    ref = _reference_forward(x, weight, bias, stride=2, padding=1)
    OH = (H + 2 * 1 - KH) // 2 + 1
    OW = (W + 2 * 1 - KW) // 2 + 1
    assert out.shape == (N, Cout, OH, OW)
    # bf16 operands (and bf16 activations on v6e/v7x) with f32 accumulation.
    assert jnp.allclose(out, ref, atol=2e-2, rtol=2e-2), "mismatch vs reference"

    print("KERNEL_OK")
</pallas_src>

<mosaic_0001>
module attributes {stable_mosaic.version = 11 : i64} {
  func.func @_conv_gemm_kernel(%arg0: i32, %arg1: memref<128x32xbf16, #tpu.memory_space<vmem>>, %arg2: memref<60x32xbf16, #tpu.memory_space<vmem>>, %arg3: memref<60x1xf32, #tpu.memory_space<vmem>>, %arg4: memref<60x128xf32, #tpu.memory_space<vmem>>) attributes {dimension_semantics = [#tpu.dimension_semantics<parallel>], iteration_bounds = array<i64: 1>, scalar_prefetch = 0 : i64, scratch_operands = 0 : i64, tpu.core_type = #tpu.core_type<tc>, window_params = [{transform_indices = @transform_0, window_bounds = array<i64: 128, 32>}, {pipeline_mode = #tpu.pipeline_mode<synchronous>, transform_indices = @transform_1, window_bounds = array<i64: 60, 32>}, {pipeline_mode = #tpu.pipeline_mode<synchronous>, transform_indices = @transform_2, window_bounds = array<i64: 60, 1>}, {transform_indices = @transform_3, window_bounds = array<i64: 60, 128>}]} {
    %c0 = arith.constant 0 : index
    %c0_0 = arith.constant 0 : index
    %0 = vector.load %arg2[%c0, %c0_0] : memref<60x32xbf16, #tpu.memory_space<vmem>>, vector<60x32xbf16>
    %c0_1 = arith.constant 0 : index
    %c0_2 = arith.constant 0 : index
    %1 = vector.load %arg1[%c0_1, %c0_2] : memref<128x32xbf16, #tpu.memory_space<vmem>>, vector<128x32xbf16>
    %cst = arith.constant dense<0.000000e+00> : vector<60x128xf32>
    %2 = tpu.matmul %0, %1, %cst {dimension_numbers = #tpu.dot_dimension_numbers<[1], [1], [0], [0], [0, 0, 1, 0], [], []>} : vector<60x32xbf16>, vector<128x32xbf16>, vector<60x128xf32> -> vector<60x128xf32>
    %c0_3 = arith.constant 0 : index
    %c0_4 = arith.constant 0 : index
    %3 = vector.load %arg3[%c0_3, %c0_4] : memref<60x1xf32, #tpu.memory_space<vmem>>, vector<60x1xf32>
    %4 = vector.broadcast %3 : vector<60x1xf32> to vector<60x128xf32>
    %5 = arith.addf %2, %4 : vector<60x128xf32>
    %6 = math.tanh %5 : vector<60x128xf32>
    %cst_5 = arith.constant 5.000000e-01 : f32
    %7 = vector.broadcast %cst_5 : f32 to vector<60x128xf32>
    %8 = arith.mulf %7, %6 : vector<60x128xf32>
    %9 = math.tanh %8 : vector<60x128xf32>
    %cst_6 = arith.constant 1.000000e+00 : f32
    %10 = vector.broadcast %cst_6 : f32 to vector<60x128xf32>
    %11 = arith.addf %9, %10 : vector<60x128xf32>
    %cst_7 = arith.constant 5.000000e-01 : f32
    %12 = vector.broadcast %cst_7 : f32 to vector<60x128xf32>
    %13 = arith.mulf %12, %11 : vector<60x128xf32>
    %c0_8 = arith.constant 0 : index
    %c0_9 = arith.constant 0 : index
    %14 = vector.load %arg4[%c0_8, %c0_9] : memref<60x128xf32, #tpu.memory_space<vmem>>, vector<60x128xf32>
    tpu.vector_store %arg4[%c0_8, %c0_9], %13 {strides = array<i32>} : memref<60x128xf32, #tpu.memory_space<vmem>>, vector<60x128xf32>,
    return
  }
  func.func @transform_0(%arg0: i32) -> (i32, i32) {
    %c0_i32 = arith.constant 0 : i32
    %c0_i32_0 = arith.constant 0 : i32
    return %arg0, %c0_i32 : i32, i32
  }
  func.func @transform_1(%arg0: i32) -> (i32, i32) {
    %c0_i32 = arith.constant 0 : i32
    %c0_i32_0 = arith.constant 0 : i32
    %c0_i32_1 = arith.constant 0 : i32
    return %c0_i32, %c0_i32_0 : i32, i32
  }
  func.func @transform_2(%arg0: i32) -> (i32, i32) {
    %c0_i32 = arith.constant 0 : i32
    %c0_i32_0 = arith.constant 0 : i32
    %c0_i32_1 = arith.constant 0 : i32
    return %c0_i32, %c0_i32_0 : i32, i32
  }
  func.func @transform_3(%arg0: i32) -> (i32, i32) {
    %c0_i32 = arith.constant 0 : i32
    %c0_i32_0 = arith.constant 0 : i32
    return %c0_i32, %arg0 : i32, i32
  }
}

</mosaic_0001>

<llo_original>
// kernel: model_tanh_forward.1
$region0: #{model_tanh_forward.1}
  #allocation0 [shape = 'u32[]', space=smem, size = 0x4, offset = 0x4, fixed_abs, tag = 'smem constant byte address 0x4 - core index']
  #allocation1 [shape = 'u32[72,128]{1,0:T(1,128)}', space=vmem, size = 0x9000, scoped, tag = 'internal scratch']
  %s0 = inlined_call_operand.vmem [shape: bf16[128,32], index: 0, kind: input, shape index: {}]
  %s1 = inlined_call_operand.vmem [shape: bf16[60,32], index: 1, kind: input, shape index: {}]
  %s2 = inlined_call_operand.vmem [shape: f32[60,1], index: 2, kind: input, shape index: {}]
  %s3 = inlined_call_operand.vmem [shape: f32[60,128], index: 3, kind: output, shape index: {}]
  %s4 = sld [smem:[#allocation0]]
  $region22: #{model_tanh_forward.1} parent=0
    _
  %s6 = ssub.s32 1, %s4
  %s7 = scalar_select 0, %s6, %s4
  // Predicated region
  $region2: #{model_tanh_forward.1} parent=0 // pred_check
    _
  $region3: #{model_tanh_forward.1} parent=0 // pred_check_branch
    %9 = sbr.rel (0) target = $region5
  $region4: #{model_tanh_forward.1} parent=0 // pred_region
    _
  $region5: #{model_tanh_forward.1} parent=0 // pred_fallthru
    _
  // Predicated region
  $region6: #{model_tanh_forward.1} parent=0 // pred_check
    _
  $region7: #{model_tanh_forward.1} parent=0 // pred_check_branch
    %11 = sbr.rel (0) target = $region9
  $region8: #{model_tanh_forward.1} parent=0 // pred_region
    _
  $region9: #{model_tanh_forward.1} parent=0 // pred_fallthru
    _
  // Predicated region
  $region10: #{model_tanh_forward.1} parent=0 // pred_check
    _
  $region11: #{model_tanh_forward.1} parent=0 // pred_check_branch
    %13 = sbr.rel (0) target = $region13
  $region12: #{model_tanh_forward.1} parent=0 // pred_region
    _
  $region13: #{model_tanh_forward.1} parent=0 // pred_fallthru
    _
  %v14 = vld [vmem:[%s1] sm:$0xf]
  %v15 = vld [vmem:[%s1 + $0x4] sm:$0xf]
  %v16 = vld [vmem:[%s1 + $0x8] sm:$0xf]
  %v17 = vld [vmem:[%s1 + $0xc] sm:$0xf]
  %v18 = vld [vmem:[%s1 + $0x10] sm:$0xf]
  %v19 = vld [vmem:[%s1 + $0x14] sm:$0xf]
  %v20 = vld [vmem:[%s1 + $0x18] sm:$0xf]
  %v21 = vld [vmem:[%s1 + $0x1c] sm:$0x3]
  %v22 = vld [vmem:[%s0] sm:$0xf]
  %v23 = vld [vmem:[%s0 + $0x4] sm:$0xf]
  %v24 = vld [vmem:[%s0 + $0x8] sm:$0xf]
  %v25 = vld [vmem:[%s0 + $0xc] sm:$0xf]
  %v26 = vld [vmem:[%s0 + $0x10] sm:$0xf]
  %v27 = vld [vmem:[%s0 + $0x14] sm:$0xf]
  %v28 = vld [vmem:[%s0 + $0x18] sm:$0xf]
  %v29 = vld [vmem:[%s0 + $0x1c] sm:$0xf]
  %v30 = vld [vmem:[%s0 + $0x20] sm:$0xf]
  %v31 = vld [vmem:[%s0 + $0x24] sm:$0xf]
  %v32 = vld [vmem:[%s0 + $0x28] sm:$0xf]
  %v33 = vld [vmem:[%s0 + $0x2c] sm:$0xf]
  %v34 = vld [vmem:[%s0 + $0x30] sm:$0xf]
  %v35 = vld [vmem:[%s0 + $0x34] sm:$0xf]
  %v36 = vld [vmem:[%s0 + $0x38] sm:$0xf]
  %v37 = vld [vmem:[%s0 + $0x3c] sm:$0xf]
  %v38 = vld [vmem:[%s2] sm:$0xff]
  %v39 = vld [vmem:[%s2 + $0x8] sm:$0xff]
  %v40 = vld [vmem:[%s2 + $0x10] sm:$0xff]
  %v41 = vld [vmem:[%s2 + $0x18] sm:$0xff]
  %v42 = vld [vmem:[%s2 + $0x20] sm:$0xff]
  %v43 = vld [vmem:[%s2 + $0x28] sm:$0xff]
  %v44 = vld [vmem:[%s2 + $0x30] sm:$0xff]
  %v45 = vld [vmem:[%s2 + $0x38] sm:$0xf]
  %47 = vset.pattern.permute.xlu0 0
  %48 = vperm.xlu0 %47, %v38
  %v49 = vpop.permute.xlu0 %48
  %52 = vset.pattern.permute.xlu0 0
  %53 = vperm.xlu0 %52, %v39
  %v54 = vpop.permute.xlu0 %53
  %57 = vset.pattern.permute.xlu0 0
  %58 = vperm.xlu0 %57, %v40
  %v59 = vpop.permute.xlu0 %58
  %62 = vset.pattern.permute.xlu0 0
  %63 = vperm.xlu0 %62, %v41
  %v64 = vpop.permute.xlu0 %63
  %67 = vset.pattern.permute.xlu0 0
  %68 = vperm.xlu0 %67, %v42
  %v69 = vpop.permute.xlu0 %68
  %72 = vset.pattern.permute.xlu0 0
  %73 = vperm.xlu0 %72, %v43
  %v74 = vpop.permute.xlu0 %73
  %77 = vset.pattern.permute.xlu0 0
  %78 = vperm.xlu0 %77, %v44
  %v79 = vpop.permute.xlu0 %78
  %82 = vset.pattern.permute.xlu0 0
  %83 = vperm.xlu0 %82, %v45
  %v84 = vpop.permute.xlu0 %83
  %v94 = vunpack.c.l.b16 %v14
  %v95 = vunpack.c.l.b16 %v15
  %v96 = vunpack.c.l.b16 %v16
  %v97 = vunpack.c.l.b16 %v17
  %v98 = vunpack.c.l.b16 %v18
  %v99 = vunpack.c.l.b16 %v19
  %v100 = vunpack.c.l.b16 %v20
  %v101 = vunpack.c.l.b16 %v21
  %v102 = vpack.c.b16 %v95, %v94
  %v103 = vpack.c.b16 %v97, %v96
  %v104 = vpack.c.b16 %v99, %v98
  %v105 = vpack.c.b16 %v101, %v100
  %v122 = vunpack.c.l.b16 %v22
  %v123 = vunpack.c.l.b16 %v23
  %v124 = vunpack.c.l.b16 %v24
  %v125 = vunpack.c.l.b16 %v25
  %v126 = vunpack.c.l.b16 %v26
  %v127 = vunpack.c.l.b16 %v27
  %v128 = vunpack.c.l.b16 %v28
  %v129 = vunpack.c.l.b16 %v29
  %v130 = vunpack.c.l.b16 %v30
  %v131 = vunpack.c.l.b16 %v31
  %v132 = vunpack.c.l.b16 %v32
  %v133 = vunpack.c.l.b16 %v33
  %v134 = vunpack.c.l.b16 %v34
  %v135 = vunpack.c.l.b16 %v35
  %v136 = vunpack.c.l.b16 %v36
  %v137 = vunpack.c.l.b16 %v37
  %v138 = vpack.c.b16 %v123, %v122
  %v139 = vpack.c.b16 %v125, %v124
  %v140 = vpack.c.b16 %v127, %v126
  %v141 = vpack.c.b16 %v129, %v128
  %v142 = vpack.c.b16 %v131, %v130
  %v143 = vpack.c.b16 %v133, %v132
  %v144 = vpack.c.b16 %v135, %v134
  %v145 = vpack.c.b16 %v137, %v136
  %vm146 = vcmask 261120
  %v148 = vsel %vm146, %v102, 0
  %v151 = vsel %vm146, %v103, 0
  %v154 = vsel %vm146, %v104, 0
  %v157 = vsel %vm146, %v105, 0
  %v160 = vsel %vm146, %v138, 0
  %v163 = vsel %vm146, %v139, 0
  %v166 = vsel %vm146, %v140, 0
  %v169 = vsel %vm146, %v141, 0
  %v172 = vsel %vm146, %v142, 0
  %v175 = vsel %vm146, %v143, 0
  %v178 = vsel %vm146, %v144, 0
  %v181 = vsel %vm146, %v145, 0
  %183 = vmatpush.bf16.xpose.msra.mxu0 %v181
  %184 = vmatpush.bf16.xpose.msra.mxu0 %v178
  %185 = vmatpush.bf16.xpose.msra.mxu0 %v175
  %186 = vmatpush.bf16.xpose.msra.mxu0 %v172
  %187 = vmatpush.bf16.xpose.msra.mxu0 %v169
  %188 = vmatpush.bf16.xpose.msra.mxu0 %v166
  %189 = vmatpush.bf16.xpose.msra.mxu0 %v163
  %190 = vmatpush.bf16.xpose.msra.mxu0 %v160
  %191 = vmatmul.bf16.gmra.mxu0 %v148
  %v192 = vpop.f32.mrf.mxu0
  %v193 = vadd.f32 %v49, %v192
  %v194 = vpop.f32.mrf.mxu0
  %v195 = vadd.f32 %v54, %v194
  %196 = vmatmul.bf16.gmra.mxu0 %v151
  %v197 = vpop.f32.mrf.mxu0
  %v198 = vadd.f32 %v59, %v197
  %v199 = vpop.f32.mrf.mxu0
  %v200 = vadd.f32 %v64, %v199
  %201 = vmatmul.bf16.gmra.mxu0 %v154
  %v202 = vpop.f32.mrf.mxu0
  %v203 = vadd.f32 %v69, %v202
  %v204 = vpop.f32.mrf.mxu0
  %v205 = vadd.f32 %v74, %v204
  %206 = vmatmul.bf16.gmra.mxu0 %v157
  %v207 = vpop.f32.mrf.mxu0
  %v208 = vadd.f32 %v79, %v207
  %v209 = vpop.f32.mrf.mxu0
  %v210 = vadd.f32 %v84, %v209
  %211 = vdwg.mxu0
  %v212 = vtanh.pop %v193
  %v213 = vtanh.pop %v195
  %v214 = vtanh.pop %v198
  %v215 = vtanh.pop %v200
  %v216 = vtanh.pop %v203
  %v217 = vtanh.pop %v205
  %v218 = vtanh.pop %v208
  %v219 = vtanh.pop %v210
  %v220 = vmul.f32 %v212, 0.5
  %v221 = vmul.f32 %v213, 0.5
  %v222 = vmul.f32 %v214, 0.5
  %v223 = vmul.f32 %v215, 0.5
  %v224 = vmul.f32 %v216, 0.5
  %v225 = vmul.f32 %v217, 0.5
  %v226 = vmul.f32 %v218, 0.5
  %v227 = vmul.f32 %v219, 0.5
  %v228 = vtanh.pop %v220
  %v229 = vtanh.pop %v221
  %v230 = vtanh.pop %v222
  %v231 = vtanh.pop %v223
  %v232 = vtanh.pop %v224
  %v233 = vtanh.pop %v225
  %v234 = vtanh.pop %v226
  %v235 = vtanh.pop %v227
  %v236 = vadd.f32 %v228, 1.0
  %v237 = vadd.f32 %v229, 1.0
  %v238 = vadd.f32 %v230, 1.0
  %v239 = vadd.f32 %v231, 1.0
  %v240 = vadd.f32 %v232, 1.0
  %v241 = vadd.f32 %v233, 1.0
  %v242 = vadd.f32 %v234, 1.0
  %v243 = vadd.f32 %v235, 1.0
  %v244 = vmul.f32 %v236, 0.5
  %v245 = vmul.f32 %v237, 0.5
  %v246 = vmul.f32 %v238, 0.5
  %v247 = vmul.f32 %v239, 0.5
  %v248 = vmul.f32 %v240, 0.5
  %v249 = vmul.f32 %v241, 0.5
  %v250 = vmul.f32 %v242, 0.5
  %v251 = vmul.f32 %v243, 0.5
  %252 = vst [vmem:[%s3] sm:$0xff] %v244
  %253 = vst [vmem:[%s3 + $0x8] sm:$0xff] %v245
  %254 = vst [vmem:[%s3 + $0x10] sm:$0xff] %v246
  %255 = vst [vmem:[%s3 + $0x18] sm:$0xff] %v247
  %256 = vst [vmem:[%s3 + $0x20] sm:$0xff] %v248
  %257 = vst [vmem:[%s3 + $0x28] sm:$0xff] %v249
  %258 = vst [vmem:[%s3 + $0x30] sm:$0xff] %v250
  %259 = vst [vmem:[%s3 + $0x38] sm:$0xf] %v251
  // Predicated region
  $region14: #{model_tanh_forward.1} parent=0 // pred_check
    _
  $region15: #{model_tanh_forward.1} parent=0 // pred_check_branch
    %261 = sbr.rel (0) target = $region17
  $region16: #{model_tanh_forward.1} parent=0 // pred_region
    _
  $region17: #{model_tanh_forward.1} parent=0 // pred_fallthru
    _
  // Predicated region
  $region18: #{model_tanh_forward.1} parent=0 // pred_check
    _
  $region19: #{model_tanh_forward.1} parent=0 // pred_check_branch
    %263 = sbr.rel (0) target = $region21
  $region20: #{model_tanh_forward.1} parent=0 // pred_region
    _
  $region21: #{model_tanh_forward.1} parent=0 // pred_fallthru
    _

</llo_original>
